<compile_context>
chip_gen: v7x
topology: tpu7x:2x2x1
jax: 0.10.0
libtpu: 0.0.40
codegen_flags: <defaults>
</compile_context>

<pallas_src>
import functools
from typing import NamedTuple

import jax
import jax.numpy as jnp
from jax import lax
from jax.experimental import pallas as pl
from jax.experimental.pallas import tpu as pltpu

_LANE = 128


def _round_up(x, m):
    return (x + m - 1) // m * m


def _sublane_for(dtype):
    itemsize = jnp.dtype(dtype).itemsize
    if itemsize == 1:
        return 32
    if itemsize == 2:
        return 16
    return 8


def _pick_h_chunk(hp):
    for c in (512, 256, 128):
        if hp % c == 0:
            return c
    return hp


class PreparedParams(NamedTuple):
    """Lane-padded, dtype-cast parameters (built once, reused across calls)."""
    w1: jax.Array   # (Dp, Hp)   compute_dtype
    b1: jax.Array   # (1, Hp)    f32
    w2: jax.Array   # (Hp, Dp)   compute_dtype
    b2: jax.Array   # (1, Dp)    f32
    w3: jax.Array   # (Dp, 128)  compute_dtype
    b3: jax.Array   # (1, 128)   f32
    d: int
    h: int


def prepare_params(params, compute_dtype=jnp.bfloat16):
    """Pad weights/biases to lane multiples and cast the MXU operands once."""
    w1, b1, w2, b2, w3, b3 = params
    D, H = w1.shape            # H == 2 * D
    Dp = max(_round_up(D, _LANE), _LANE)
    Hp = max(_round_up(H, _LANE), _LANE)
    OUTP = _LANE               # real output width is 2; padded columns are zero.

    def pad2(a, shape):
        a = jnp.asarray(a, jnp.float32).reshape(-1, a.shape[-1]) if a.ndim == 2 \
            else jnp.asarray(a, jnp.float32).reshape(1, -1)
        return jnp.zeros(shape, jnp.float32).at[:a.shape[0], :a.shape[1]].set(a)

    w1_p = pad2(w1, (Dp, Hp)).astype(compute_dtype)
    w2_p = pad2(w2, (Hp, Dp)).astype(compute_dtype)
    w3_p = pad2(w3, (Dp, OUTP)).astype(compute_dtype)
    b1_p = pad2(b1, (1, Hp))                 # biases stay f32 (f32 bias-add + ReLU)
    b2_p = pad2(b2, (1, Dp))
    b3_p = pad2(b3, (1, OUTP))
    return PreparedParams(w1_p, b1_p, w2_p, b2_p, w3_p, b3_p, int(D), int(H))


def _gen_decoder_kernel(x_ref, w1_ref, b1_ref, w2_ref, b2_ref, w3_ref, b3_ref,
                        o_ref, h2_acc_ref, *, h_chunk, num_h_chunks):
    # x: (tile_n, Dp); weights (in, out); biases f32 (1, out).
    x = x_ref[...]

    # Fuse layer1+layer2 over the hidden dim so the full (tile_n, Hp) h1 never
    # materializes: per chunk, h1_c = relu(x @ W1[:, c] + b1[c]) is immediately
    # reduced into h2 (f32 VMEM scratch) via h1_c @ W2[c, :].
    h2_acc_ref[...] = jnp.zeros_like(h2_acc_ref)

    def h_body(c, carry):
        off = pl.multiple_of(c * h_chunk, h_chunk)
        w1_c = w1_ref[:, pl.ds(off, h_chunk)]
        b1_c = b1_ref[:, pl.ds(off, h_chunk)]
        h1_c = jnp.dot(x, w1_c, preferred_element_type=jnp.float32)
        h1_c = jnp.maximum(h1_c + b1_c, 0.0)          # f32 bias + ReLU (VPU-safe on v5e)
        w2_c = w2_ref[pl.ds(off, h_chunk), :]
        h2_acc_ref[...] += jnp.dot(h1_c.astype(w2_c.dtype), w2_c,
                                   preferred_element_type=jnp.float32)
        return carry

    lax.fori_loop(0, num_h_chunks, h_body, 0, unroll=True)

    h2 = jnp.maximum(h2_acc_ref[...] + b2_ref[...], 0.0)
    out = jnp.dot(h2.astype(w3_ref.dtype), w3_ref[...],
                  preferred_element_type=jnp.float32)  # (tile_n, 128), cols >=2 are 0
    o_ref[...] = (out + b3_ref[...]).astype(o_ref.dtype)


def gen_decoder_forward(x_fuse, params, *, tile_n=None, compute_dtype=jnp.bfloat16):
    """x_fuse: (..., embed_dim) -> (..., 2) float32.

    `params` is either the raw (w1, b1, w2, b2, w3, b3) tuple or a PreparedParams
    (preferred: call prepare_params once and reuse). When PreparedParams is passed,
    its weight dtype defines the MXU compute dtype; accumulation is always f32.
    """
    if not isinstance(params, PreparedParams):
        params = prepare_params(params, compute_dtype)
    compute_dtype = params.w1.dtype

    D = params.d
    Dp, Hp = params.w1.shape
    OUTP = params.w3.shape[1]

    lead_shape = x_fuse.shape[:-1]
    x2d = x_fuse.reshape(-1, D)
    n = x2d.shape[0]

    sub = _sublane_for(compute_dtype)   # 16 for bf16, 8 for f32

    # Row tiling: big tiles (default 512) to amortize grid-step overhead and MXU
    # fill; guarantee >= 2 grid steps when the row count allows it so the
    # "parallel" row axis can shard across both v7x TensorCores.
    if tile_n is None:
        tile_n = 512
    tile_n = _round_up(int(tile_n), sub)
    n_rounded = _round_up(max(n, 1), sub)
    if n_rounded <= tile_n:
        if n_rounded >= 2 * sub:
            tile_n = _round_up((n_rounded + 1) // 2, sub)
        else:
            tile_n = n_rounded
    n_pad = _round_up(max(n, 1), tile_n)

    # Pad x only when actually needed, built directly in compute_dtype.
    x2d = x2d.astype(compute_dtype)
    if (n_pad, Dp) != (n, D):
        x_p = jnp.zeros((n_pad, Dp), compute_dtype).at[:n, :D].set(x2d)
    else:
        x_p = x2d

    h_chunk = _pick_h_chunk(Hp)
    num_h_chunks = Hp // h_chunk

    grid = (n_pad // tile_n,)

    # VMEM budget: x/out double-buffered, weights+biases single-buffered
    # (Buffered(1), constant block), plus the h2 f32 accumulator scratch and the
    # live h1 chunk. Capped at 64 MiB so the same config fits v7x physical VMEM.
    w_bytes = jnp.dtype(compute_dtype).itemsize
    vmem_needed = (
        2 * tile_n * Dp * w_bytes                        # x tile (double-buffered)
        + 2 * tile_n * OUTP * 4                          # out tile (double-buffered)
        + (Dp * Hp + Hp * Dp + Dp * OUTP) * w_bytes      # weights (single-buffered)
        + (Hp + Dp + OUTP) * 4                           # biases (single-buffered)
        + tile_n * Dp * 4                                # h2 accumulator scratch
        + tile_n * h_chunk * 4                           # live h1 chunk
    )
    vmem_limit = int(min(max(vmem_needed + (4 << 20), 32 << 20), 64 << 20))

    single = pl.Buffered(1)   # resident operands: block never changes, no DMA exposed

    kernel = functools.partial(_gen_decoder_kernel,
                               h_chunk=h_chunk, num_h_chunks=num_h_chunks)

    out = pl.pallas_call(
        kernel,
        out_shape=jax.ShapeDtypeStruct((n_pad, OUTP), jnp.float32),
        grid_spec=pltpu.PrefetchScalarGridSpec(
            num_scalar_prefetch=0,
            grid=grid,
            in_specs=[
                pl.BlockSpec((tile_n, Dp), lambda i: (i, 0)),                       # x tile
                pl.BlockSpec((Dp, Hp), lambda i: (0, 0), pipeline_mode=single),     # W1
                pl.BlockSpec((1, Hp), lambda i: (0, 0), pipeline_mode=single),      # b1 (f32)
                pl.BlockSpec((Hp, Dp), lambda i: (0, 0), pipeline_mode=single),     # W2
                pl.BlockSpec((1, Dp), lambda i: (0, 0), pipeline_mode=single),      # b2 (f32)
                pl.BlockSpec((Dp, OUTP), lambda i: (0, 0), pipeline_mode=single),   # W3
                pl.BlockSpec((1, OUTP), lambda i: (0, 0), pipeline_mode=single),    # b3 (f32)
            ],
            out_specs=pl.BlockSpec((tile_n, OUTP), lambda i: (i, 0)),
            scratch_shapes=[pltpu.VMEM((tile_n, Dp), jnp.float32)],                 # h2 acc
        ),
        compiler_params=pltpu.CompilerParams(
            dimension_semantics=("parallel",),
            vmem_limit_bytes=vmem_limit,
        ),
    )(x_p, params.w1, params.b1, params.w2, params.b2, params.w3, params.b3)

    out = out[:n, :2]
    return out.reshape(*lead_shape, 2)


def init_params(key, embed_dim):
    """Deterministic init matching nn.Linear shapes (stored transposed as (in, out))."""
    D = embed_dim
    H = 2 * embed_dim
    ks = jax.random.split(key, 6)

    def lin(kw, kb, fan_in, fan_out):
        bound = 1.0 / jnp.sqrt(fan_in)
        w = jax.random.uniform(kw, (fan_in, fan_out), jnp.float32, -bound, bound)
        b = jax.random.uniform(kb, (1, fan_out), jnp.float32, -bound, bound)
        return w, b

    w1, b1 = lin(ks[0], ks[1], D, H)
    w2, b2 = lin(ks[2], ks[3], H, D)
    w3, b3 = lin(ks[4], ks[5], D, 2)
    return (w1, b1, w2, b2, w3, b3)


def reference_forward(x_fuse, params):
    w1, b1, w2, b2, w3, b3 = params
    h = jnp.maximum(x_fuse @ w1 + b1[0], 0.0)
    h = jnp.maximum(h @ w2 + b2[0], 0.0)
    return h @ w3 + b3[0]


if __name__ == "__main__":
    # Small shapes: batch=2, seq (traj queries)=8, embed_dim=32.
    embed_dim = 32
    batch, seq = 2, 8

    key = jax.random.PRNGKey(0)
    k_x, k_p = jax.random.split(key)
    x_fuse = jax.random.normal(k_x, (batch, seq, embed_dim), dtype=jnp.float32)
    params = init_params(k_p, embed_dim)

    ref = reference_forward(x_fuse, params)

    # Exact-path check: f32 MXU inputs must match the pure-JAX reference tightly.
    prep_f32 = prepare_params(params, compute_dtype=jnp.float32)
    out_f32 = jax.block_until_ready(gen_decoder_forward(x_fuse, prep_f32))
    assert out_f32.shape == (batch, seq, 2), out_f32.shape
    assert jnp.allclose(out_f32, ref, atol=1e-5, rtol=1e-5), \
        float(jnp.max(jnp.abs(out_f32 - ref)))

    # Default fast path: bf16 MXU inputs, f32 accumulation (looser tolerance).
    prep_bf16 = prepare_params(params)   # bfloat16 weights, prepared once, reusable
    out_bf16 = jax.block_until_ready(gen_decoder_forward(x_fuse, prep_bf16))
    assert out_bf16.shape == (batch, seq, 2), out_bf16.shape
    assert jnp.allclose(out_bf16, ref, atol=5e-2, rtol=5e-2), \
        float(jnp.max(jnp.abs(out_bf16 - ref)))

    print("KERNEL_OK")
</pallas_src>

<mosaic_0001>
module attributes {stable_mosaic.version = 11 : i64} {
  func.func @_gen_decoder_kernel(%arg0: i32, %arg1: memref<8x128xf32, #tpu.memory_space<vmem>>, %arg2: memref<128x128xf32, #tpu.memory_space<vmem>>, %arg3: memref<1x128xf32, #tpu.memory_space<vmem>>, %arg4: memref<128x128xf32, #tpu.memory_space<vmem>>, %arg5: memref<1x128xf32, #tpu.memory_space<vmem>>, %arg6: memref<128x128xf32, #tpu.memory_space<vmem>>, %arg7: memref<1x128xf32, #tpu.memory_space<vmem>>, %arg8: memref<8x128xf32, #tpu.memory_space<vmem>>, %arg9: memref<8x128xf32, #tpu.memory_space<vmem>>) attributes {dimension_semantics = [#tpu.dimension_semantics<parallel>], iteration_bounds = array<i64: 2>, scalar_prefetch = 0 : i64, scratch_operands = 1 : i64, tpu.core_type = #tpu.core_type<tc>, window_params = [{transform_indices = @transform_0, window_bounds = array<i64: 8, 128>}, {pipeline_mode = #tpu.pipeline_mode<synchronous>, transform_indices = @transform_1, window_bounds = array<i64: 128, 128>}, {pipeline_mode = #tpu.pipeline_mode<synchronous>, transform_indices = @transform_2, window_bounds = array<i64: 1, 128>}, {pipeline_mode = #tpu.pipeline_mode<synchronous>, transform_indices = @transform_3, window_bounds = array<i64: 128, 128>}, {pipeline_mode = #tpu.pipeline_mode<synchronous>, transform_indices = @transform_4, window_bounds = array<i64: 1, 128>}, {pipeline_mode = #tpu.pipeline_mode<synchronous>, transform_indices = @transform_5, window_bounds = array<i64: 128, 128>}, {pipeline_mode = #tpu.pipeline_mode<synchronous>, transform_indices = @transform_6, window_bounds = array<i64: 1, 128>}, {transform_indices = @transform_7, window_bounds = array<i64: 8, 128>}]} {
    %c0 = arith.constant 0 : index
    %c0_0 = arith.constant 0 : index
    %0 = vector.load %arg1[%c0, %c0_0] : memref<8x128xf32, #tpu.memory_space<vmem>>, vector<8x128xf32>
    %cst = arith.constant 0.000000e+00 : f32
    %1 = vector.broadcast %cst : f32 to vector<8x128xf32>
    %c0_1 = arith.constant 0 : index
    %c0_2 = arith.constant 0 : index
    %2 = vector.load %arg9[%c0_1, %c0_2] : memref<8x128xf32, #tpu.memory_space<vmem>>, vector<8x128xf32>
    tpu.vector_store %arg9[%c0_1, %c0_2], %1 {strides = array<i32>} : memref<8x128xf32, #tpu.memory_space<vmem>>, vector<8x128xf32>,
    %c0_i32 = arith.constant 0 : i32
    %c128_i32 = arith.constant 128 : i32
    %3 = arith.muli %c0_i32, %c128_i32 : i32
    %4 = tpu.assume_multiple %3, 128 : i32
    %c0_3 = arith.constant 0 : index
    %5 = arith.index_cast %4 : i32 to index
    %6 = vector.load %arg2[%c0_3, %5] : memref<128x128xf32, #tpu.memory_space<vmem>>, vector<128x128xf32>
    %c0_4 = arith.constant 0 : index
    %7 = arith.index_cast %4 : i32 to index
    %8 = vector.load %arg3[%c0_4, %7] : memref<1x128xf32, #tpu.memory_space<vmem>>, vector<1x128xf32>
    %cst_5 = arith.constant dense<0.000000e+00> : vector<8x128xf32>
    %9 = tpu.matmul %0, %6, %cst_5 {dimension_numbers = #tpu.dot_dimension_numbers<[1], [0], [0], [1], [0, 0, 1, 1], [], []>} : vector<8x128xf32>, vector<128x128xf32>, vector<8x128xf32> -> vector<8x128xf32>
    %10 = vector.broadcast %8 : vector<1x128xf32> to vector<8x128xf32>
    %11 = arith.addf %9, %10 : vector<8x128xf32>
    %cst_6 = arith.constant 0.000000e+00 : f32
    %12 = vector.broadcast %cst_6 : f32 to vector<8x128xf32>
    %13 = arith.maximumf %11, %12 : vector<8x128xf32>
    %14 = arith.index_cast %4 : i32 to index
    %c0_7 = arith.constant 0 : index
    %15 = vector.load %arg4[%14, %c0_7] : memref<128x128xf32, #tpu.memory_space<vmem>>, vector<128x128xf32>
    %c0_8 = arith.constant 0 : index
    %c0_9 = arith.constant 0 : index
    %16 = vector.load %arg9[%c0_8, %c0_9] : memref<8x128xf32, #tpu.memory_space<vmem>>, vector<8x128xf32>
    %cst_10 = arith.constant dense<0.000000e+00> : vector<8x128xf32>
    %17 = tpu.matmul %13, %15, %cst_10 {dimension_numbers = #tpu.dot_dimension_numbers<[1], [0], [0], [1], [0, 0, 1, 1], [], []>} : vector<8x128xf32>, vector<128x128xf32>, vector<8x128xf32> -> vector<8x128xf32>
    %18 = arith.addf %16, %17 : vector<8x128xf32>
    %c0_11 = arith.constant 0 : index
    %c0_12 = arith.constant 0 : index
    %19 = vector.load %arg9[%c0_11, %c0_12] : memref<8x128xf32, #tpu.memory_space<vmem>>, vector<8x128xf32>
    tpu.vector_store %arg9[%c0_11, %c0_12], %18 {strides = array<i32>} : memref<8x128xf32, #tpu.memory_space<vmem>>, vector<8x128xf32>,
    %c1_i32 = arith.constant 1 : i32
    %c0_13 = arith.constant 0 : index
    %c0_14 = arith.constant 0 : index
    %20 = vector.load %arg9[%c0_13, %c0_14] : memref<8x128xf32, #tpu.memory_space<vmem>>, vector<8x128xf32>
    %c0_15 = arith.constant 0 : index
    %c0_16 = arith.constant 0 : index
    %21 = vector.load %arg5[%c0_15, %c0_16] : memref<1x128xf32, #tpu.memory_space<vmem>>, vector<1x128xf32>
    %22 = vector.broadcast %21 : vector<1x128xf32> to vector<8x128xf32>
    %23 = arith.addf %20, %22 : vector<8x128xf32>
    %cst_17 = arith.constant 0.000000e+00 : f32
    %24 = vector.broadcast %cst_17 : f32 to vector<8x128xf32>
    %25 = arith.maximumf %23, %24 : vector<8x128xf32>
    %c0_18 = arith.constant 0 : index
    %c0_19 = arith.constant 0 : index
    %26 = vector.load %arg6[%c0_18, %c0_19] : memref<128x128xf32, #tpu.memory_space<vmem>>, vector<128x128xf32>
    %cst_20 = arith.constant dense<0.000000e+00> : vector<8x128xf32>
    %27 = tpu.matmul %25, %26, %cst_20 {dimension_numbers = #tpu.dot_dimension_numbers<[1], [0], [0], [1], [0, 0, 1, 1], [], []>} : vector<8x128xf32>, vector<128x128xf32>, vector<8x128xf32> -> vector<8x128xf32>
    %c0_21 = arith.constant 0 : index
    %c0_22 = arith.constant 0 : index
    %28 = vector.load %arg7[%c0_21, %c0_22] : memref<1x128xf32, #tpu.memory_space<vmem>>, vector<1x128xf32>
    %29 = vector.broadcast %28 : vector<1x128xf32> to vector<8x128xf32>
    %30 = arith.addf %27, %29 : vector<8x128xf32>
    %c0_23 = arith.constant 0 : index
    %c0_24 = arith.constant 0 : index
    %31 = vector.load %arg8[%c0_23, %c0_24] : memref<8x128xf32, #tpu.memory_space<vmem>>, vector<8x128xf32>
    tpu.vector_store %arg8[%c0_23, %c0_24], %30 {strides = array<i32>} : memref<8x128xf32, #tpu.memory_space<vmem>>, vector<8x128xf32>,
    return
  }
  func.func @transform_0(%arg0: i32) -> (i32, i32) {
    %c0_i32 = arith.constant 0 : i32
    %c0_i32_0 = arith.constant 0 : i32
    return %arg0, %c0_i32 : i32, i32
  }
  func.func @transform_1(%arg0: i32) -> (i32, i32) {
    %c0_i32 = arith.constant 0 : i32
    %c0_i32_0 = arith.constant 0 : i32
    %c0_i32_1 = arith.constant 0 : i32
    return %c0_i32, %c0_i32_0 : i32, i32
  }
  func.func @transform_2(%arg0: i32) -> (i32, i32) {
    %c0_i32 = arith.constant 0 : i32
    %c0_i32_0 = arith.constant 0 : i32
    %c0_i32_1 = arith.constant 0 : i32
    return %c0_i32, %c0_i32_0 : i32, i32
  }
  func.func @transform_3(%arg0: i32) -> (i32, i32) {
    %c0_i32 = arith.constant 0 : i32
    %c0_i32_0 = arith.constant 0 : i32
    %c0_i32_1 = arith.constant 0 : i32
    return %c0_i32, %c0_i32_0 : i32, i32
  }
  func.func @transform_4(%arg0: i32) -> (i32, i32) {
    %c0_i32 = arith.constant 0 : i32
    %c0_i32_0 = arith.constant 0 : i32
    %c0_i32_1 = arith.constant 0 : i32
    return %c0_i32, %c0_i32_0 : i32, i32
  }
  func.func @transform_5(%arg0: i32) -> (i32, i32) {
    %c0_i32 = arith.constant 0 : i32
    %c0_i32_0 = arith.constant 0 : i32
    %c0_i32_1 = arith.constant 0 : i32
    return %c0_i32, %c0_i32_0 : i32, i32
  }
  func.func @transform_6(%arg0: i32) -> (i32, i32) {
    %c0_i32 = arith.constant 0 : i32
    %c0_i32_0 = arith.constant 0 : i32
    %c0_i32_1 = arith.constant 0 : i32
    return %c0_i32, %c0_i32_0 : i32, i32
  }
  func.func @transform_7(%arg0: i32) -> (i32, i32) {
    %c0_i32 = arith.constant 0 : i32
    %c0_i32_0 = arith.constant 0 : i32
    return %arg0, %c0_i32 : i32, i32
  }
}

</mosaic_0001>

<llo_original>
// kernel: tpu_custom_call.1
$region0: #{tpu_custom_call.1}
  #allocation0 [shape = 'u32[]', space=smem, size = 0x4, offset = 0x4, fixed_abs, tag = 'smem constant byte address 0x4 - core index']
  #allocation1 [shape = 'u32[144,128]{1,0:T(1,128)}', space=vmem, size = 0x12000, scoped, tag = 'internal scratch']
  #allocation2 [shape = 'f32[8,128]{1,0:T(8,128)}', space=vmem, size = 0x1000, scoped, tag = 'scratch operand']
  %s0 = inlined_call_operand.hbm [shape: f32[16,128], index: 0, kind: input, shape index: {}]
  %s1 = inlined_call_operand.hbm [shape: f32[128,128], index: 1, kind: input, shape index: {}]
  %s2 = inlined_call_operand.vmem [shape: f32[1,128], index: 2, kind: input, shape index: {}]
  %s3 = inlined_call_operand.hbm [shape: f32[128,128], index: 3, kind: input, shape index: {}]
  %s4 = inlined_call_operand.vmem [shape: f32[1,128], index: 4, kind: input, shape index: {}]
  %s5 = inlined_call_operand.hbm [shape: f32[128,128], index: 5, kind: input, shape index: {}]
  %s6 = inlined_call_operand.vmem [shape: f32[1,128], index: 6, kind: input, shape index: {}]
  %s7 = inlined_call_operand.hbm [shape: f32[16,128], index: 7, kind: output, shape index: {}]
  %s8 = sld [smem:[#allocation0]]
  $region77: #{tpu_custom_call.1} parent=0
    _
  %s10 = ssub.s32 1, %s8
  %s11 = scalar_select 0, %s10, %s8
  $region1: #{tpu_custom_call.1} parent=0
    #allocation3 [shape = 'u8[8192]{0}', space=vmem, size = 0x2000, scoped, tag = 'input window, operand 0']
    #allocation4 [shape = 's32[2]{0}', space=sflag, size = 0x8, scoped, tag = 'scoped memory for tpu_custom_call.1']
    #allocation5 [shape = 's32[2]{0}', space=sflag, size = 0x8, scoped, tag = 'scoped memory for tpu_custom_call.1']
    #allocation6 [shape = 'u8[65536]{0}', space=vmem, size = 0x10000, scoped, tag = 'input window, operand 1, single buffered']
    #allocation7 [shape = 's32[1]{0}', space=sflag, size = 0x4, scoped, tag = 'scoped memory for tpu_custom_call.1']
    #allocation8 [shape = 'u8[65536]{0}', space=vmem, size = 0x10000, scoped, tag = 'input window, operand 3, single buffered']
    #allocation9 [shape = 'u8[65536]{0}', space=vmem, size = 0x10000, scoped, tag = 'input window, operand 5, single buffered']
    #allocation10 [shape = 's32[1]{0}', space=sflag, size = 0x4, scoped, tag = 'scoped memory for tpu_custom_call.1']
    #allocation11 [shape = 'u8[8192]{0}', space=vmem, size = 0x2000, scoped, tag = 'output window, operand 0']
    %12 = vsyncpa [#allocation4], 0
    %s13 = scalar_lea.sflag [#allocation4], 1
    %14 = vsyncpa %s13, 0
    %15 = vsyncpa [#allocation7], 0
    %16 = vsyncpa [#allocation10], 0
    %17 = vsyncpa [#allocation5], 0
    %s18 = scalar_lea.sflag [#allocation5], 1
    %19 = vsyncpa %s18, 0
    loop: start=0, step=1, limit=4
    $region2: #{tpu_custom_call.1} parent=1 // loop_pre_header
      _
    $region3: #{tpu_custom_call.1} parent=1 // loop_header
      %s21 = sphi 0, %s25
      %p22 = scmp.ge.s32.totalorder %s21, 4
      %s31 = sphi 0, %s33
      %s34 = sphi 0, %s31
      %s35 = sphi 0, %s34
      %s51 = sphi 0, %s35
      %s55 = sphi 0, %s55
      %s57 = sphi 0, %s55
      %s58 = sphi 0, %s57
      %s72 = sphi 0, %s58
      %s76 = sphi 0, %s76
      %s78 = sphi 0, %s76
      %s79 = sphi 0, %s78
      %s93 = sphi 0, %s79
      %s97 = sphi 0, %s97
      %s99 = sphi 0, %s97
      %s100 = sphi 0, %s99
      %s114 = sphi 0, %s100
      %s118 = sphi 0, %s118
      %s120 = sphi 0, %s118
      %s121 = sphi 0, %s120
      %s135 = sphi 0, %s121
      %s139 = sphi 0, %s139
      %s141 = sphi 0, %s139
      %s142 = sphi 0, %s141
      %s156 = sphi 0, %s142
      %s160 = sphi 0, %s160
      %s162 = sphi 0, %s160
      %s163 = sphi 0, %s162
      %s177 = sphi 0, %s163
      %s183 = sphi 0, %s185
      %s186 = sphi 0, %s183
      %s187 = sphi 0, %s186
      %s203 = sphi 0, %s187
    $region4: #{tpu_custom_call.1} parent=1 // loop_header_branch
      %24 = sbr.rel (%p22) target = $region8
    $region5: #{tpu_custom_call.1} parent=1 // loop_body
      %s26 = ssub.s32 %s21, 1
      %s27 = ssub.s32 %s21, 2
      %s28 = sadd.s32 %s21, 1
      %s29 = ssub.s32 %s21, %s28
      %p30 = scmp.eq.s32.totalorder %s29, 0
      %s32 = sadd.s32 %s31, 1
      %s33 = scalar_select %p30, %s31, %s32
      %p36 = pneg %p30
      %p37 = scmp.eq.s32.totalorder %s21, 1
      %p38 = por %p36, %p37
      %p39 = scmp.ne.s32.totalorder %s31, %s34
      %p40 = scmp.eq.s32.totalorder %s21, 0
      %p41 = por %p39, %p40
      %p42 = scmp.ne.s32.totalorder %s31, %s34
      %p43 = scmp.eq.s32.totalorder %s26, 1
      %p44 = por %p42, %p43
      %p45 = scmp.ne.s32.totalorder %s34, %s35
      %p46 = scmp.eq.s32.totalorder %s26, 0
      %p47 = por %p45, %p46
      %p48 = scmp.ne.s32.totalorder %s34, %s35
      %p49 = scmp.eq.s32.totalorder %s27, 1
      %p50 = por %p48, %p49
      %p52 = scmp.ne.s32.totalorder %s35, %s51
      %p53 = scmp.eq.s32.totalorder %s27, 0
      %p54 = por %p52, %p53
      %s56 = sadd.s32 %s55, 1
      %p59 = scmp.eq.s32.totalorder %s21, 1
      %p60 = scmp.ne.s32.totalorder %s55, %s57
      %p61 = scmp.eq.s32.totalorder %s21, 0
      %p62 = por %p60, %p61
      %p63 = scmp.ne.s32.totalorder %s55, %s57
      %p64 = scmp.eq.s32.totalorder %s26, 1
      %p65 = por %p63, %p64
      %p66 = scmp.ne.s32.totalorder %s57, %s58
      %p67 = scmp.eq.s32.totalorder %s26, 0
      %p68 = por %p66, %p67
      %p69 = scmp.ne.s32.totalorder %s57, %s58
      %p70 = scmp.eq.s32.totalorder %s27, 1
      %p71 = por %p69, %p70
      %p73 = scmp.ne.s32.totalorder %s58, %s72
      %p74 = scmp.eq.s32.totalorder %s27, 0
      %p75 = por %p73, %p74
      %s77 = sadd.s32 %s76, 1
      %p80 = scmp.eq.s32.totalorder %s21, 1
      %p81 = scmp.ne.s32.totalorder %s76, %s78
      %p82 = scmp.eq.s32.totalorder %s21, 0
      %p83 = por %p81, %p82
      %p84 = scmp.ne.s32.totalorder %s76, %s78
      %p85 = scmp.eq.s32.totalorder %s26, 1
      %p86 = por %p84, %p85
      %p87 = scmp.ne.s32.totalorder %s78, %s79
      %p88 = scmp.eq.s32.totalorder %s26, 0
      %p89 = por %p87, %p88
      %p90 = scmp.ne.s32.totalorder %s78, %s79
      %p91 = scmp.eq.s32.totalorder %s27, 1
      %p92 = por %p90, %p91
      %p94 = scmp.ne.s32.totalorder %s79, %s93
      %p95 = scmp.eq.s32.totalorder %s27, 0
      %p96 = por %p94, %p95
      %s98 = sadd.s32 %s97, 1
      %p101 = scmp.eq.s32.totalorder %s21, 1
      %p102 = scmp.ne.s32.totalorder %s97, %s99
      %p103 = scmp.eq.s32.totalorder %s21, 0
      %p104 = por %p102, %p103
      %p105 = scmp.ne.s32.totalorder %s97, %s99
      %p106 = scmp.eq.s32.totalorder %s26, 1
      %p107 = por %p105, %p106
      %p108 = scmp.ne.s32.totalorder %s99, %s100
      %p109 = scmp.eq.s32.totalorder %s26, 0
      %p110 = por %p108, %p109
      %p111 = scmp.ne.s32.totalorder %s99, %s100
      %p112 = scmp.eq.s32.totalorder %s27, 1
      %p113 = por %p111, %p112
      %p115 = scmp.ne.s32.totalorder %s100, %s114
      %p116 = scmp.eq.s32.totalorder %s27, 0
      %p117 = por %p115, %p116
      %s119 = sadd.s32 %s118, 1
      %p122 = scmp.eq.s32.totalorder %s21, 1
      %p123 = scmp.ne.s32.totalorder %s118, %s120
      %p124 = scmp.eq.s32.totalorder %s21, 0
      %p125 = por %p123, %p124
      %p126 = scmp.ne.s32.totalorder %s118, %s120
      %p127 = scmp.eq.s32.totalorder %s26, 1
      %p128 = por %p126, %p127
      %p129 = scmp.ne.s32.totalorder %s120, %s121
      %p130 = scmp.eq.s32.totalorder %s26, 0
      %p131 = por %p129, %p130
      %p132 = scmp.ne.s32.totalorder %s120, %s121
      %p133 = scmp.eq.s32.totalorder %s27, 1
      %p134 = por %p132, %p133
      %p136 = scmp.ne.s32.totalorder %s121, %s135
      %p137 = scmp.eq.s32.totalorder %s27, 0
      %p138 = por %p136, %p137
      %s140 = sadd.s32 %s139, 1
      %p143 = scmp.eq.s32.totalorder %s21, 1
      %p144 = scmp.ne.s32.totalorder %s139, %s141
      %p145 = scmp.eq.s32.totalorder %s21, 0
      %p146 = por %p144, %p145
      %p147 = scmp.ne.s32.totalorder %s139, %s141
      %p148 = scmp.eq.s32.totalorder %s26, 1
      %p149 = por %p147, %p148
      %p150 = scmp.ne.s32.totalorder %s141, %s142
      %p151 = scmp.eq.s32.totalorder %s26, 0
      %p152 = por %p150, %p151
      %p153 = scmp.ne.s32.totalorder %s141, %s142
      %p154 = scmp.eq.s32.totalorder %s27, 1
      %p155 = por %p153, %p154
      %p157 = scmp.ne.s32.totalorder %s142, %s156
      %p158 = scmp.eq.s32.totalorder %s27, 0
      %p159 = por %p157, %p158
      %s161 = sadd.s32 %s160, 1
      %p164 = scmp.eq.s32.totalorder %s21, 1
      %p165 = scmp.ne.s32.totalorder %s160, %s162
      %p166 = scmp.eq.s32.totalorder %s21, 0
      %p167 = por %p165, %p166
      %p168 = scmp.ne.s32.totalorder %s160, %s162
      %p169 = scmp.eq.s32.totalorder %s26, 1
      %p170 = por %p168, %p169
      %p171 = scmp.ne.s32.totalorder %s162, %s163
      %p172 = scmp.eq.s32.totalorder %s26, 0
      %p173 = por %p171, %p172
      %p174 = scmp.ne.s32.totalorder %s162, %s163
      %p175 = scmp.eq.s32.totalorder %s27, 1
      %p176 = por %p174, %p175
      %p178 = scmp.ne.s32.totalorder %s163, %s177
      %p179 = scmp.eq.s32.totalorder %s27, 0
      %p180 = por %p178, %p179
      %s181 = ssub.s32 %s21, %s28
      %p182 = scmp.eq.s32.totalorder %s181, 0
      %s184 = sadd.s32 %s183, 1
      %s185 = scalar_select %p182, %s183, %s184
      %p188 = pneg %p182
      %p189 = scmp.eq.s32.totalorder %s21, 1
      %p190 = por %p188, %p189
      %p191 = scmp.ne.s32.totalorder %s183, %s186
      %p192 = scmp.eq.s32.totalorder %s21, 0
      %p193 = por %p191, %p192
      %p194 = scmp.ne.s32.totalorder %s183, %s186
      %p195 = scmp.eq.s32.totalorder %s26, 1
      %p196 = por %p194, %p195
      %p197 = scmp.ne.s32.totalorder %s186, %s187
      %p198 = scmp.eq.s32.totalorder %s26, 0
      %p199 = por %p197, %p198
      %p200 = scmp.ne.s32.totalorder %s186, %s187
      %p201 = scmp.eq.s32.totalorder %s27, 1
      %p202 = por %p200, %p201
      %p204 = scmp.ne.s32.totalorder %s187, %s203
      %p205 = scmp.eq.s32.totalorder %s27, 0
      %p206 = por %p204, %p205
      %p207 = scmp.le.s32.totalorder 1, %s21
      %p208 = scmp.lt.s32.totalorder %s21, 3
      %p209 = pnand %p207, %p208
      %p210 = pneg %p209
      // Predicated region
      $region9: #{tpu_custom_call.1} parent=5 // pred_check
        _
      $region10: #{tpu_custom_call.1} parent=5 // pred_check_branch
        %212 = sbr.rel (%p209) target = $region12
      $region11: #{tpu_custom_call.1} parent=5 // pred_region
        %s213 = ssub.s32 %s21, 1
        // Predicated region
        $region13: #{tpu_custom_call.1} parent=11 // pred_check
          %p214 = pneg %p68
        $region14: #{tpu_custom_call.1} parent=11 // pred_check_branch
          %216 = sbr.rel (%p214) target = $region16
        $region15: #{tpu_custom_call.1} parent=11 // pred_region
          %s218 = ssub.s32 2048, 2048
          %219 = vsyncadd [#allocation7], %s218
          %s220 = sshll.u32 [#allocation6], 4
          %s221 = int_to_ptr.vmem [resolvable:$true] %s220
          %226 = dma.hbm_to_vmem [thread:$0]  %s1, 2048, %s221, [#allocation7], 128, 128, 8
        $region16: #{tpu_custom_call.1} parent=11 // pred_fallthru
          _
        // Predicated region
        $region17: #{tpu_custom_call.1} parent=11 // pred_check
          %p227 = pneg %p89
        $region18: #{tpu_custom_call.1} parent=11 // pred_check_branch
          %229 = sbr.rel (%p227) target = $region20
        $region19: #{tpu_custom_call.1} parent=11 // pred_region
          _
        $region20: #{tpu_custom_call.1} parent=11 // pred_fallthru
          _
        // Predicated region
        $region21: #{tpu_custom_call.1} parent=11 // pred_check
          %p230 = pneg %p110
        $region22: #{tpu_custom_call.1} parent=11 // pred_check_branch
          %232 = sbr.rel (%p230) target = $region24
        $region23: #{tpu_custom_call.1} parent=11 // pred_region
          %s234 = ssub.s32 2048, 2048
          %235 = vsyncadd [#allocation7], %s234
          %s236 = sshll.u32 [#allocation8], 4
          %s237 = int_to_ptr.vmem [resolvable:$true] %s236
          %242 = dma.hbm_to_vmem [thread:$0]  %s3, 2048, %s237, [#allocation7], 128, 128, 8
        $region24: #{tpu_custom_call.1} parent=11 // pred_fallthru
          _
        // Predicated region
        $region25: #{tpu_custom_call.1} parent=11 // pred_check
          %p243 = pneg %p131
        $region26: #{tpu_custom_call.1} parent=11 // pred_check_branch
          %245 = sbr.rel (%p243) target = $region28
        $region27: #{tpu_custom_call.1} parent=11 // pred_region
          _
        $region28: #{tpu_custom_call.1} parent=11 // pred_fallthru
          _
        // Predicated region
        $region29: #{tpu_custom_call.1} parent=11 // pred_check
          %p246 = pneg %p152
        $region30: #{tpu_custom_call.1} parent=11 // pred_check_branch
          %248 = sbr.rel (%p246) target = $region32
        $region31: #{tpu_custom_call.1} parent=11 // pred_region
          %s250 = ssub.s32 2048, 2048
          %251 = vsyncadd [#allocation10], %s250
          %s252 = sshll.u32 [#allocation9], 4
          %s253 = int_to_ptr.vmem [resolvable:$true] %s252
          %258 = dma.hbm_to_vmem [thread:$0]  %s5, 2048, %s253, [#allocation10], 128, 128, 8
        $region32: #{tpu_custom_call.1} parent=11 // pred_fallthru
          _
        // Predicated region
        $region33: #{tpu_custom_call.1} parent=11 // pred_check
          %p259 = pneg %p173
        $region34: #{tpu_custom_call.1} parent=11 // pred_check_branch
          %261 = sbr.rel (%p259) target = $region36
        $region35: #{tpu_custom_call.1} parent=11 // pred_region
          _
        $region36: #{tpu_custom_call.1} parent=11 // pred_fallthru
          _
      $region12: #{tpu_custom_call.1} parent=5 // pred_fallthru
        _
      %p262 = scmp.lt.s32.totalorder %s21, 2
      // Predicated region
      $region37: #{tpu_custom_call.1} parent=5 // pred_check
        %p263 = pneg %p262
      $region38: #{tpu_custom_call.1} parent=5 // pred_check_branch
        %265 = sbr.rel (%p263) target = $region40
      $region39: #{tpu_custom_call.1} parent=5 // pred_region
        // Predicated region
        $region41: #{tpu_custom_call.1} parent=39 // pred_check
          %p266 = pneg %p41
        $region42: #{tpu_custom_call.1} parent=39 // pred_check_branch
          %268 = sbr.rel (%p266) target = $region44
        $region43: #{tpu_custom_call.1} parent=39 // pred_region
          %s269 = sand.u32 %s31, 1
          %s270 = scalar_lea.sflag [#allocation4], %s269
          %s271 = sand.u32 %s31, 1
          %s272 = smul.addr %s271, 8
          %s273 = scalar_lea.vmem [#allocation3], %s272
          %s275 = ssub.s32 128, 128
          %276 = vsyncadd %s270, %s275
          %s277 = smul.addr %s21, 128
          %s278 = scalar_lea.hbm %s0, %s277
          %s280 = sshll.u32 %s273, 4
          %s281 = int_to_ptr.vmem [resolvable:$true] %s280
          %283 = dma.hbm_to_vmem [thread:$0]  %s278, 128, %s281, %s270
        $region44: #{tpu_custom_call.1} parent=39 // pred_fallthru
          _
      $region40: #{tpu_custom_call.1} parent=5 // pred_fallthru
        _
      %p284 = scmp.le.s32.totalorder 1, %s21
      %p285 = scmp.lt.s32.totalorder %s21, 3
      %p286 = pnand %p284, %p285
      %p287 = pneg %p286
      // Predicated region
      $region45: #{tpu_custom_call.1} parent=5 // pred_check
        _
      $region46: #{tpu_custom_call.1} parent=5 // pred_check_branch
        %289 = sbr.rel (%p286) target = $region48
      $region47: #{tpu_custom_call.1} parent=5 // pred_region
        %s290 = ssub.s32 %s21, 1
        %s291 = sand.u32 %s34, 1
        %s292 = scalar_lea.sflag [#allocation4], %s291
        %s293 = sand.u32 %s34, 1
        %s294 = smul.addr %s293, 8
        %s295 = scalar_lea.vmem [#allocation3], %s294
        // Predicated region
        $region49: #{tpu_custom_call.1} parent=47 // pred_check
          %p296 = pneg %p47
        $region50: #{tpu_custom_call.1} parent=47 // pred_check_branch
          %298 = sbr.rel (%p296) target = $region52
        $region51: #{tpu_custom_call.1} parent=47 // pred_region
          %299 = dma.done %s292, 128
        $region52: #{tpu_custom_call.1} parent=47 // pred_fallthru
          _
        // Predicated region
        $region53: #{tpu_custom_call.1} parent=47 // pred_check
          %p300 = pneg %p68
        $region54: #{tpu_custom_call.1} parent=47 // pred_check_branch
          %302 = sbr.rel (%p300) target = $region56
        $region55: #{tpu_custom_call.1} parent=47 // pred_region
          %303 = dma.done [#allocation7], 2048
        $region56: #{tpu_custom_call.1} parent=47 // pred_fallthru
          _
        // Predicated region
        $region57: #{tpu_custom_call.1} parent=47 // pred_check
          %p304 = pneg %p110
        $region58: #{tpu_custom_call.1} parent=47 // pred_check_branch
          %306 = sbr.rel (%p304) target = $region60
        $region59: #{tpu_custom_call.1} parent=47 // pred_region
          %307 = dma.done [#allocation7], 2048
        $region60: #{tpu_custom_call.1} parent=47 // pred_fallthru
          _
        // Predicated region
        $region61: #{tpu_custom_call.1} parent=47 // pred_check
          %p308 = pneg %p152
        $region62: #{tpu_custom_call.1} parent=47 // pred_check_branch
          %310 = sbr.rel (%p308) target = $region64
        $region63: #{tpu_custom_call.1} parent=47 // pred_region
          %311 = dma.done [#allocation10], 2048
        $region64: #{tpu_custom_call.1} parent=47 // pred_fallthru
          _
        %s312 = sand.u32 %s34, 1
        %s313 = scalar_lea.sflag [#allocation4], %s312
        %s314 = sand.u32 %s34, 1
        %s315 = smul.addr %s314, 8
        %s316 = scalar_lea.vmem [#allocation3], %s315
        %p317 = pneg %p47
        %p318 = pneg %p44
        %p319 = pneg %p68
        %p320 = pneg %p65
        %p321 = pneg %p89
        %p322 = pneg %p86
        %p323 = pneg %p110
        %p324 = pneg %p107
        %p325 = pneg %p131
        %p326 = pneg %p128
        %p327 = pneg %p152
        %p328 = pneg %p149
        %p329 = pneg %p173
        %p330 = pneg %p170
        %p331 = pneg %p199
        %p332 = pneg %p196
        %s333 = sand.u32 %s186, 1
        %s334 = scalar_lea.sflag [#allocation5], %s333
        %s335 = sand.u32 %s186, 1
        %s336 = smul.addr %s335, 8
        %s337 = scalar_lea.vmem [#allocation11], %s336
        %v338 = vld [vmem:[%s295] sm:$0xff]
        %339 = vst [vmem:[#allocation2] sm:$0xff] 0.0
        %v340 = vld [vmem:[#allocation6] sm:$0xff]
        %v341 = vld [vmem:[#allocation6 + $0x8] sm:$0xff]
        %v342 = vld [vmem:[#allocation6 + $0x10] sm:$0xff]
        %v343 = vld [vmem:[#allocation6 + $0x18] sm:$0xff]
        %v344 = vld [vmem:[#allocation6 + $0x20] sm:$0xff]
        %v345 = vld [vmem:[#allocation6 + $0x28] sm:$0xff]
        %v346 = vld [vmem:[#allocation6 + $0x30] sm:$0xff]
        %v347 = vld [vmem:[#allocation6 + $0x38] sm:$0xff]
        %v348 = vld [vmem:[#allocation6 + $0x40] sm:$0xff]
        %v349 = vld [vmem:[#allocation6 + $0x48] sm:$0xff]
        %v350 = vld [vmem:[#allocation6 + $0x50] sm:$0xff]
        %v351 = vld [vmem:[#allocation6 + $0x58] sm:$0xff]
        %v352 = vld [vmem:[#allocation6 + $0x60] sm:$0xff]
        %v353 = vld [vmem:[#allocation6 + $0x68] sm:$0xff]
        %v354 = vld [vmem:[#allocation6 + $0x70] sm:$0xff]
        %v355 = vld [vmem:[#allocation6 + $0x78] sm:$0xff]
        %v356 = vld [vmem:[%s2] sm:$0x1]
        %v358 = vlaneseq
        %v359 = vshrl.u32 %v358, 7
        %v360 = vsub.s32 0, %v359
        %v361 = vrot.slane %v356, %v360
        %363 = vmatprep.subr.mxu0 0.0
        %364 = vmatpush1.msra.mxu0 %v340
        %365 = vmatprep.subr.mxu0 0.0
        %366 = vmatpush1.msra.mxu0 %v341
        %367 = vmatprep.subr.mxu0 0.0
        %368 = vmatpush1.msra.mxu0 %v342
        %369 = vmatprep.subr.mxu0 0.0
        %370 = vmatpush1.msra.mxu0 %v343
        %371 = vmatprep.subr.mxu0 0.0
        %372 = vmatpush1.msra.mxu0 %v344
        %373 = vmatprep.subr.mxu0 0.0
        %374 = vmatpush1.msra.mxu0 %v345
        %375 = vmatprep.subr.mxu0 0.0
        %376 = vmatpush1.msra.mxu0 %v346
        %377 = vmatprep.subr.mxu0 0.0
        %378 = vmatpush1.msra.mxu0 %v347
        %379 = vmatprep.subr.mxu0 0.0
        %380 = vmatpush1.msra.mxu0 %v348
        %381 = vmatprep.subr.mxu0 0.0
        %382 = vmatpush1.msra.mxu0 %v349
        %383 = vmatprep.subr.mxu0 0.0
        %384 = vmatpush1.msra.mxu0 %v350
        %385 = vmatprep.subr.mxu0 0.0
        %386 = vmatpush1.msra.mxu0 %v351
        %387 = vmatprep.subr.mxu0 0.0
        %388 = vmatpush1.msra.mxu0 %v352
        %389 = vmatprep.subr.mxu0 0.0
        %390 = vmatpush1.msra.mxu0 %v353
        %391 = vmatprep.subr.mxu0 0.0
        %392 = vmatpush1.msra.mxu0 %v354
        %393 = vmatprep.subr.mxu0 0.0
        %394 = vmatpush1.msra.mxu0 %v355
        %395 = vmatprep.subr.mxu0 0.0
        %396 = vmatpush1.msra.mxu0 0.0
        %397 = vmatprep.subr.mxu0 0.0
        %398 = vmatpush1.msra.mxu0 0.0
        %399 = vmatprep.subr.mxu0 0.0
        %400 = vmatpush1.msra.mxu0 0.0
        %401 = vmatprep.subr.mxu0 0.0
        %402 = vmatpush1.msra.mxu0 0.0
        %403 = vmatprep.subr.mxu0 0.0
        %404 = vmatpush1.msra.mxu0 0.0
        %405 = vmatprep.subr.mxu0 0.0
        %406 = vmatpush1.msra.mxu0 0.0
        %407 = vmatprep.subr.mxu0 0.0
        %408 = vmatpush1.msra.mxu0 0.0
        %409 = vmatprep.subr.mxu0 0.0
        %410 = vmatpush1.msra.mxu0 0.0
        %411 = vmatprep.subr.mxu0 0.0
        %412 = vmatpush1.msra.mxu0 0.0
        %413 = vmatprep.subr.mxu0 0.0
        %414 = vmatpush1.msra.mxu0 0.0
        %415 = vmatprep.subr.mxu0 0.0
        %416 = vmatpush1.msra.mxu0 0.0
        %417 = vmatprep.subr.mxu0 0.0
        %418 = vmatpush1.msra.mxu0 0.0
        %419 = vmatprep.subr.mxu0 0.0
        %420 = vmatpush1.msra.mxu0 0.0
        %421 = vmatprep.subr.mxu0 0.0
        %422 = vmatpush1.msra.mxu0 0.0
        %423 = vmatprep.subr.mxu0 0.0
        %424 = vmatpush1.msra.mxu0 0.0
        %425 = vmatprep.subr.mxu0 0.0
        %426 = vmatpush1.msra.mxu0 0.0
        %427 = vmatprep.mubr.f32.mxu0 0.0
        %428 = vmatmul.mubr.f32.gmra.mrb[0].mxu0 %v338
        %v429 = vpop.f32.mrb[0].mxu0
        %v430 = vadd.f32 %v361, %v429
        %v431 = vpop.f32.mrb[0].mxu0
        %432 = vdwg.mxu0
        %v433 = vmax.f32 %v430, 0.0
        %v434 = vld [vmem:[#allocation8] sm:$0xff]
        %v435 = vld [vmem:[#allocation8 + $0x8] sm:$0xff]
        %v436 = vld [vmem:[#allocation8 + $0x10] sm:$0xff]
        %v437 = vld [vmem:[#allocation8 + $0x18] sm:$0xff]
        %v438 = vld [vmem:[#allocation8 + $0x20] sm:$0xff]
        %v439 = vld [vmem:[#allocation8 + $0x28] sm:$0xff]
        %v440 = vld [vmem:[#allocation8 + $0x30] sm:$0xff]
        %v441 = vld [vmem:[#allocation8 + $0x38] sm:$0xff]
        %v442 = vld [vmem:[#allocation8 + $0x40] sm:$0xff]
        %v443 = vld [vmem:[#allocation8 + $0x48] sm:$0xff]
        %v444 = vld [vmem:[#allocation8 + $0x50] sm:$0xff]
        %v445 = vld [vmem:[#allocation8 + $0x58] sm:$0xff]
        %v446 = vld [vmem:[#allocation8 + $0x60] sm:$0xff]
        %v447 = vld [vmem:[#allocation8 + $0x68] sm:$0xff]
        %v448 = vld [vmem:[#allocation8 + $0x70] sm:$0xff]
        %v449 = vld [vmem:[#allocation8 + $0x78] sm:$0xff]
        %v450 = vld [vmem:[#allocation2] sm:$0xff]
        %451 = vmatprep.subr.mxu0 0.0
        %452 = vmatpush1.msra.mxu0 %v434
        %453 = vmatprep.subr.mxu0 0.0
        %454 = vmatpush1.msra.mxu0 %v435
        %455 = vmatprep.subr.mxu0 0.0
        %456 = vmatpush1.msra.mxu0 %v436
        %457 = vmatprep.subr.mxu0 0.0
        %458 = vmatpush1.msra.mxu0 %v437
        %459 = vmatprep.subr.mxu0 0.0
        %460 = vmatpush1.msra.mxu0 %v438
        %461 = vmatprep.subr.mxu0 0.0
        %462 = vmatpush1.msra.mxu0 %v439
        %463 = vmatprep.subr.mxu0 0.0
        %464 = vmatpush1.msra.mxu0 %v440
        %465 = vmatprep.subr.mxu0 0.0
        %466 = vmatpush1.msra.mxu0 %v441
        %467 = vmatprep.subr.mxu0 0.0
        %468 = vmatpush1.msra.mxu0 %v442
        %469 = vmatprep.subr.mxu0 0.0
        %470 = vmatpush1.msra.mxu0 %v443
        %471 = vmatprep.subr.mxu0 0.0
        %472 = vmatpush1.msra.mxu0 %v444
        %473 = vmatprep.subr.mxu0 0.0
        %474 = vmatpush1.msra.mxu0 %v445
        %475 = vmatprep.subr.mxu0 0.0
        %476 = vmatpush1.msra.mxu0 %v446
        %477 = vmatprep.subr.mxu0 0.0
        %478 = vmatpush1.msra.mxu0 %v447
        %479 = vmatprep.subr.mxu0 0.0
        %480 = vmatpush1.msra.mxu0 %v448
        %481 = vmatprep.subr.mxu0 0.0
        %482 = vmatpush1.msra.mxu0 %v449
        %483 = vmatprep.subr.mxu0 0.0
        %484 = vmatpush1.msra.mxu0 0.0
        %485 = vmatprep.subr.mxu0 0.0
        %486 = vmatpush1.msra.mxu0 0.0
        %487 = vmatprep.subr.mxu0 0.0
        %488 = vmatpush1.msra.mxu0 0.0
        %489 = vmatprep.subr.mxu0 0.0
        %490 = vmatpush1.msra.mxu0 0.0
        %491 = vmatprep.subr.mxu0 0.0
        %492 = vmatpush1.msra.mxu0 0.0
        %493 = vmatprep.subr.mxu0 0.0
        %494 = vmatpush1.msra.mxu0 0.0
        %495 = vmatprep.subr.mxu0 0.0
        %496 = vmatpush1.msra.mxu0 0.0
        %497 = vmatprep.subr.mxu0 0.0
        %498 = vmatpush1.msra.mxu0 0.0
        %499 = vmatprep.subr.mxu0 0.0
        %500 = vmatpush1.msra.mxu0 0.0
        %501 = vmatprep.subr.mxu0 0.0
        %502 = vmatpush1.msra.mxu0 0.0
        %503 = vmatprep.subr.mxu0 0.0
        %504 = vmatpush1.msra.mxu0 0.0
        %505 = vmatprep.subr.mxu0 0.0
        %506 = vmatpush1.msra.mxu0 0.0
        %507 = vmatprep.subr.mxu0 0.0
        %508 = vmatpush1.msra.mxu0 0.0
        %509 = vmatprep.subr.mxu0 0.0
        %510 = vmatpush1.msra.mxu0 0.0
        %511 = vmatprep.subr.mxu0 0.0
        %512 = vmatpush1.msra.mxu0 0.0
        %513 = vmatprep.subr.mxu0 0.0
        %514 = vmatpush1.msra.mxu0 0.0
        %515 = vmatprep.mubr.f32.mxu0 0.0
        %516 = vmatmul.mubr.f32.gmra.mrb[0].mxu0 %v433
        %v517 = vpop.f32.mrb[0].mxu0
        %v518 = vadd.f32 0.0, %v517
        %v519 = vpop.f32.mrb[0].mxu0
        %520 = vdwg.mxu0
        %v521 = vadd.f32 %v450, %v518
        %522 = vst [vmem:[#allocation2] sm:$0xff] %v521
        %v523 = vld [vmem:[#allocation2] sm:$0xff]
        %v524 = vld [vmem:[%s4] sm:$0x1]
        %v526 = vlaneseq
        %v527 = vshrl.u32 %v526, 7
        %v528 = vsub.s32 0, %v527
        %v529 = vrot.slane %v524, %v528
        %v531 = vadd.f32 %v523, %v529
        %v532 = vmax.f32 %v531, 0.0
        %v533 = vld [vmem:[#allocation9] sm:$0xff]
        %v534 = vld [vmem:[#allocation9 + $0x8] sm:$0xff]
        %v535 = vld [vmem:[#allocation9 + $0x10] sm:$0xff]
        %v536 = vld [vmem:[#allocation9 + $0x18] sm:$0xff]
        %v537 = vld [vmem:[#allocation9 + $0x20] sm:$0xff]
        %v538 = vld [vmem:[#allocation9 + $0x28] sm:$0xff]
        %v539 = vld [vmem:[#allocation9 + $0x30] sm:$0xff]
        %v540 = vld [vmem:[#allocation9 + $0x38] sm:$0xff]
        %v541 = vld [vmem:[#allocation9 + $0x40] sm:$0xff]
        %v542 = vld [vmem:[#allocation9 + $0x48] sm:$0xff]
        %v543 = vld [vmem:[#allocation9 + $0x50] sm:$0xff]
        %v544 = vld [vmem:[#allocation9 + $0x58] sm:$0xff]
        %v545 = vld [vmem:[#allocation9 + $0x60] sm:$0xff]
        %v546 = vld [vmem:[#allocation9 + $0x68] sm:$0xff]
        %v547 = vld [vmem:[#allocation9 + $0x70] sm:$0xff]
        %v548 = vld [vmem:[#allocation9 + $0x78] sm:$0xff]
        %v549 = vld [vmem:[%s6] sm:$0x1]
        %v551 = vlaneseq
        %v552 = vshrl.u32 %v551, 7
        %v553 = vsub.s32 0, %v552
        %v554 = vrot.slane %v549, %v553
        %556 = vmatprep.subr.mxu0 0.0
        %557 = vmatpush1.msra.mxu0 %v533
        %558 = vmatprep.subr.mxu0 0.0
        %559 = vmatpush1.msra.mxu0 %v534
        %560 = vmatprep.subr.mxu0 0.0
        %561 = vmatpush1.msra.mxu0 %v535
        %562 = vmatprep.subr.mxu0 0.0
        %563 = vmatpush1.msra.mxu0 %v536
        %564 = vmatprep.subr.mxu0 0.0
        %565 = vmatpush1.msra.mxu0 %v537
        %566 = vmatprep.subr.mxu0 0.0
        %567 = vmatpush1.msra.mxu0 %v538
        %568 = vmatprep.subr.mxu0 0.0
        %569 = vmatpush1.msra.mxu0 %v539
        %570 = vmatprep.subr.mxu0 0.0
        %571 = vmatpush1.msra.mxu0 %v540
        %572 = vmatprep.subr.mxu0 0.0
        %573 = vmatpush1.msra.mxu0 %v541
        %574 = vmatprep.subr.mxu0 0.0
        %575 = vmatpush1.msra.mxu0 %v542
        %576 = vmatprep.subr.mxu0 0.0
        %577 = vmatpush1.msra.mxu0 %v543
        %578 = vmatprep.subr.mxu0 0.0
        %579 = vmatpush1.msra.mxu0 %v544
        %580 = vmatprep.subr.mxu0 0.0
        %581 = vmatpush1.msra.mxu0 %v545
        %582 = vmatprep.subr.mxu0 0.0
        %583 = vmatpush1.msra.mxu0 %v546
        %584 = vmatprep.subr.mxu0 0.0
        %585 = vmatpush1.msra.mxu0 %v547
        %586 = vmatprep.subr.mxu0 0.0
        %587 = vmatpush1.msra.mxu0 %v548
        %588 = vmatprep.subr.mxu0 0.0
        %589 = vmatpush1.msra.mxu0 0.0
        %590 = vmatprep.subr.mxu0 0.0
        %591 = vmatpush1.msra.mxu0 0.0
        %592 = vmatprep.subr.mxu0 0.0
        %593 = vmatpush1.msra.mxu0 0.0
        %594 = vmatprep.subr.mxu0 0.0
        %595 = vmatpush1.msra.mxu0 0.0
        %596 = vmatprep.subr.mxu0 0.0
        %597 = vmatpush1.msra.mxu0 0.0
        %598 = vmatprep.subr.mxu0 0.0
        %599 = vmatpush1.msra.mxu0 0.0
        %600 = vmatprep.subr.mxu0 0.0
        %601 = vmatpush1.msra.mxu0 0.0
        %602 = vmatprep.subr.mxu0 0.0
        %603 = vmatpush1.msra.mxu0 0.0
        %604 = vmatprep.subr.mxu0 0.0
        %605 = vmatpush1.msra.mxu0 0.0
        %606 = vmatprep.subr.mxu0 0.0
        %607 = vmatpush1.msra.mxu0 0.0
        %608 = vmatprep.subr.mxu0 0.0
        %609 = vmatpush1.msra.mxu0 0.0
        %610 = vmatprep.subr.mxu0 0.0
        %611 = vmatpush1.msra.mxu0 0.0
        %612 = vmatprep.subr.mxu0 0.0
        %613 = vmatpush1.msra.mxu0 0.0
        %614 = vmatprep.subr.mxu0 0.0
        %615 = vmatpush1.msra.mxu0 0.0
        %616 = vmatprep.subr.mxu0 0.0
        %617 = vmatpush1.msra.mxu0 0.0
        %618 = vmatprep.subr.mxu0 0.0
        %619 = vmatpush1.msra.mxu0 0.0
        %620 = vmatprep.mubr.f32.mxu0 0.0
        %621 = vmatmul.mubr.f32.gmra.mrb[0].mxu0 %v532
        %v622 = vpop.f32.mrb[0].mxu0
        %v623 = vadd.f32 %v554, %v622
        %v624 = vpop.f32.mrb[0].mxu0
        %625 = vdwg.mxu0
        %626 = vst [vmem:[%s337] sm:$0xff] %v623
        %s627 = sand.u32 %s186, 1
        %s628 = scalar_lea.sflag [#allocation5], %s627
        %s629 = sand.u32 %s186, 1
        %s630 = smul.addr %s629, 8
        %s631 = scalar_lea.vmem [#allocation11], %s630
        // Predicated region
        $region65: #{tpu_custom_call.1} parent=47 // pred_check
          %p632 = pneg %p196
        $region66: #{tpu_custom_call.1} parent=47 // pred_check_branch
          %634 = sbr.rel (%p632) target = $region68
        $region67: #{tpu_custom_call.1} parent=47 // pred_region
          %s636 = ssub.s32 128, 128
          %637 = vsyncadd %s628, %s636
          %s638 = smul.addr %s26, 128
          %s639 = scalar_lea.hbm %s7, %s638
          %s641 = sshll.u32 %s631, 4
          %s642 = int_to_ptr.vmem [resolvable:$true] %s641
          %644 = dma.vmem_to_hbm [thread:$0]  %s642, 128, %s639, %s628
        $region68: #{tpu_custom_call.1} parent=47 // pred_fallthru
          _
      $region48: #{tpu_custom_call.1} parent=5 // pred_fallthru
        _
      %p645 = scmp.le.s32.totalorder 2, %s21
      // Predicated region
      $region69: #{tpu_custom_call.1} parent=5 // pred_check
        %p646 = pneg %p645
      $region70: #{tpu_custom_call.1} parent=5 // pred_check_branch
        %648 = sbr.rel (%p646) target = $region72
      $region71: #{tpu_custom_call.1} parent=5 // pred_region
        %s649 = ssub.s32 %s21, 2
        // Predicated region
        $region73: #{tpu_custom_call.1} parent=71 // pred_check
          %p650 = pneg %p202
        $region74: #{tpu_custom_call.1} parent=71 // pred_check_branch
          %652 = sbr.rel (%p650) target = $region76
        $region75: #{tpu_custom_call.1} parent=71 // pred_region
          %s653 = sand.u32 %s187, 1
          %s654 = scalar_lea.sflag [#allocation5], %s653
          %s655 = sand.u32 %s187, 1
          %s656 = smul.addr %s655, 8
          %s657 = scalar_lea.vmem [#allocation11], %s656
          %658 = dma.done %s654, 128
        $region76: #{tpu_custom_call.1} parent=71 // pred_fallthru
          _
      $region72: #{tpu_custom_call.1} parent=5 // pred_fallthru
        _
    $region6: #{tpu_custom_call.1} parent=1 // loop_footer
      %s25 = sadd.s32 1, %s21
    $region7: #{tpu_custom_call.1} parent=1 // loop_footer_branch
      %20 = sbr.rel target = $region3
    $region8: #{tpu_custom_call.1} parent=1 // loop_exit
      _
    %659 = vsyncpa [#allocation4], 1
    %s660 = scalar_lea.sflag [#allocation4], 1
    %661 = vsyncpa %s660, 1
    %662 = vsyncpa [#allocation7], 1
    %663 = vsyncpa [#allocation10], 1
    %664 = vsyncpa [#allocation5], 1
    %s665 = scalar_lea.sflag [#allocation5], 1
    %666 = vsyncpa %s665, 1

</llo_original>
